<compile_context>
chip_gen: v6e
topology: v6e:2x2x1
jax: 0.10.0
libtpu: 0.0.40
codegen_flags: <defaults>
</compile_context>

<pallas_src>
import jax
import jax.numpy as jnp
from jax import lax
from jax.experimental import pallas as pl
from jax.experimental.pallas import tpu as pltpu


_SLOPE = 0.1  # nn.LeakyReLU(0.1) in the original module


def _leaky_relu(v):
    return jnp.where(v >= 0, v, _SLOPE * v)


def _recip(v):
    # EUP approximate reciprocal + one Newton refinement (~f32-exact,
    # keeps the divide off the VALU slot).
    r = pl.reciprocal(v, approx=True)
    return r * (2.0 - v * r)


_CONTRACT_00 = (((0,), (0,)), ((), ()))  # contract lhs dim0 with rhs dim0 (lhs^T @ rhs)
_CONTRACT_01 = (((0,), (1,)), ((), ()))  # contract lhs dim0 with rhs dim1 (lhs^T @ rhs^T)


def hgc_kernel(x_ref, h_ref, w_v2e_ref, w_e2v_ref, wa1_ref, wa2_ref, out_ref):
    x = x_ref[...]            # (N, D_in)   f32
    H_inc = h_ref[...]        # (N, E)      f32
    w_v2e = w_v2e_ref[...]    # (D_in, D_out)
    w_e2v = w_e2v_ref[...]    # (D_out, D_out)
    wa1 = wa1_ref[...]        # (D_in, 1)   = w_v   @ a1
    wa2 = wa2_ref[...]        # (D_out, 1)  = w_e2v @ a2

    n = x.shape[0]

    # e = (H^T @ x @ w_v2e) / deg            -- H^T never materialized.
    xw = jnp.dot(x, w_v2e, preferred_element_type=jnp.float32)          # (N, D_out)
    e = lax.dot_general(H_inc, xw, dimension_numbers=_CONTRACT_00,
                        preferred_element_type=jnp.float32)             # (E, D_out)
    deg = lax.dot_general(H_inc, jnp.ones((n, 1), jnp.float32),
                          dimension_numbers=_CONTRACT_00,
                          preferred_element_type=jnp.float32)           # (E, 1)
    e = e * _recip(deg)

    # Hm = (e @ w_e2v @ a2)^T + x @ w_v @ a1 ; the edge term is produced
    # directly in (1, E) row form so no transpose is needed.
    ea2_row = lax.dot_general(wa2, e, dimension_numbers=_CONTRACT_01,
                              preferred_element_type=jnp.float32)       # (1, E)
    xa1 = jnp.dot(x, wa1, preferred_element_type=jnp.float32)           # (N, 1)
    Hm = ea2_row + xa1                                                  # (N, E)

    # soft clamp, leaky relu, masked exp, row-normalize
    Hm = jnp.tanh(Hm * 0.125) * 8.0
    Hm = _leaky_relu(Hm)
    Hm = jnp.exp(Hm) * H_inc
    Hm = Hm * _recip(jnp.sum(Hm, axis=-1, keepdims=True))

    # x_out = leakyrelu(Hm @ e @ w_e2v)
    he = jnp.dot(Hm, e, preferred_element_type=jnp.float32)             # (N, D_out)
    out = jnp.dot(he, w_e2v, preferred_element_type=jnp.float32)        # (N, D_out)
    out_ref[...] = _leaky_relu(out).astype(out_ref.dtype)


def hgc_layer(x, H_shape, w_v2e, w_e2v, w_v, a1, a2):
    """HGClayer forward. Accepts x: (N, D_in) or (B, N, D_in); H likewise."""
    x = jnp.asarray(x, jnp.float32)
    H_shape = jnp.asarray(H_shape, jnp.float32)
    w_v2e = jnp.asarray(w_v2e, jnp.float32)
    w_e2v = jnp.asarray(w_e2v, jnp.float32)

    squeeze = (x.ndim == 2)
    if squeeze:
        x = x[None]
        H_shape = H_shape[None]

    B, N, D_in = x.shape
    E = H_shape.shape[-1]
    D_out = w_v2e.shape[1]

    # Fold the rank-1 heads into the weights (outside the kernel; one-time,
    # tiny XLA matmuls).
    wa1 = jnp.asarray(w_v, jnp.float32) @ jnp.asarray(a1, jnp.float32)   # (D_in, 1)
    wa2 = w_e2v @ jnp.asarray(a2, jnp.float32)                           # (D_out, 1)

    def per_batch(shape):
        # leading batch dim squeezed out of the kernel view
        return pl.BlockSpec((None,) + shape, lambda b: (b, 0, 0))

    def shared(shape):
        # weights: same (full-extent) block for every grid step
        return pl.BlockSpec(shape, lambda b: (0, 0))

    out = pl.pallas_call(
        hgc_kernel,
        out_shape=jax.ShapeDtypeStruct((B, N, D_out), jnp.float32),
        grid=(B,),
        in_specs=[
            per_batch((N, D_in)),     # x
            per_batch((N, E)),        # H_shape
            shared((D_in, D_out)),    # w_v2e
            shared((D_out, D_out)),   # w_e2v
            shared((D_in, 1)),        # wa1 = w_v @ a1
            shared((D_out, 1)),       # wa2 = w_e2v @ a2
        ],
        out_specs=per_batch((N, D_out)),
        compiler_params=pltpu.CompilerParams(
            dimension_semantics=("parallel",)),
    )(x, H_shape, w_v2e, w_e2v, wa1, wa2)

    return out[0] if squeeze else out


def hgc_layer_ref(x, H_shape, w_v2e, w_e2v, w_v, a1, a2):
    """Pure-JAX reference mirroring the PyTorch forward (supports batching)."""
    Ht = jnp.swapaxes(H_shape, -2, -1)
    e = Ht @ x @ w_v2e
    e = e / jnp.sum(Ht, axis=-1, keepdims=True)
    Hm = jnp.swapaxes(e @ w_e2v @ a2, -2, -1) + x @ w_v @ a1
    Hm = jnp.tanh(Hm / 8.0) * 8.0
    Hm = _leaky_relu(Hm)
    Hm = jnp.exp(Hm) * H_shape
    Hm = Hm / jnp.sum(Hm, axis=-1, keepdims=True)
    out = Hm @ e @ w_e2v
    return _leaky_relu(out)


if __name__ == "__main__":
    key = jax.random.PRNGKey(0)
    k_x, k_h, k1, k2, k3, k4, k5 = jax.random.split(key, 7)

    B, N, E = 2, 16, 8        # graphs, nodes, hyperedges
    D_in, D_out = 4, 32       # input / output feature dims

    x = jax.random.normal(k_x, (B, N, D_in), dtype=jnp.float32)

    # Deterministic binary incidence matrices; guarantee every node belongs to
    # at least one edge and every edge contains at least one node (no division
    # by zero, matching a sane hypergraph input).
    H_shape = (jax.random.uniform(k_h, (B, N, E)) > 0.5).astype(jnp.float32)
    eye_like = jnp.zeros((N, E), jnp.float32).at[
        jnp.arange(N), jnp.arange(N) % E].set(1.0)
    H_shape = jnp.maximum(H_shape, eye_like[None])

    # Parameters: torch.randn equivalents, deterministic.
    w_v2e = jax.random.normal(k1, (D_in, D_out), dtype=jnp.float32)
    w_e2v = jax.random.normal(k2, (D_out, D_out), dtype=jnp.float32)
    w_v = jax.random.normal(k3, (D_in, D_out), dtype=jnp.float32)
    a1 = jax.random.normal(k4, (D_out, 1), dtype=jnp.float32)
    a2 = jax.random.normal(k5, (D_out, 1), dtype=jnp.float32)

    out = hgc_layer(x, H_shape, w_v2e, w_e2v, w_v, a1, a2)
    out = jax.block_until_ready(out)

    ref = hgc_layer_ref(x, H_shape, w_v2e, w_e2v, w_v, a1, a2)
    assert out.shape == (B, N, D_out)
    assert jnp.allclose(out, ref, atol=1e-3, rtol=1e-3), "mismatch vs reference"

    print("KERNEL_OK")
</pallas_src>

<mosaic_0001>
module attributes {stable_mosaic.version = 11 : i64} {
  func.func @hgc_kernel(%arg0: i32, %arg1: memref<1x16x4xf32, #tpu.memory_space<vmem>>, %arg2: memref<1x16x8xf32, #tpu.memory_space<vmem>>, %arg3: memref<4x32xf32, #tpu.memory_space<vmem>>, %arg4: memref<32x32xf32, #tpu.memory_space<vmem>>, %arg5: memref<4x1xf32, #tpu.memory_space<vmem>>, %arg6: memref<32x1xf32, #tpu.memory_space<vmem>>, %arg7: memref<1x16x32xf32, #tpu.memory_space<vmem>>) attributes {dimension_semantics = [#tpu.dimension_semantics<parallel>], iteration_bounds = array<i64: 2>, scalar_prefetch = 0 : i64, scratch_operands = 0 : i64, tpu.core_type = #tpu.core_type<tc>, window_params = [{transform_indices = @transform_0, window_bounds = array<i64: 1, 16, 4>}, {transform_indices = @transform_1, window_bounds = array<i64: 1, 16, 8>}, {pipeline_mode = #tpu.pipeline_mode<synchronous>, transform_indices = @transform_2, window_bounds = array<i64: 4, 32>}, {pipeline_mode = #tpu.pipeline_mode<synchronous>, transform_indices = @transform_3, window_bounds = array<i64: 32, 32>}, {pipeline_mode = #tpu.pipeline_mode<synchronous>, transform_indices = @transform_4, window_bounds = array<i64: 4, 1>}, {pipeline_mode = #tpu.pipeline_mode<synchronous>, transform_indices = @transform_5, window_bounds = array<i64: 32, 1>}, {transform_indices = @transform_6, window_bounds = array<i64: 1, 16, 32>}]} {
    %c0 = arith.constant 0 : index
    %c0_0 = arith.constant 0 : index
    %c0_1 = arith.constant 0 : index
    %0 = vector.load %arg1[%c0, %c0_0, %c0_1] : memref<1x16x4xf32, #tpu.memory_space<vmem>>, vector<1x16x4xf32>
    %1 = vector.shape_cast %0 : vector<1x16x4xf32> to vector<16x4xf32>
    %c0_2 = arith.constant 0 : index
    %c0_3 = arith.constant 0 : index
    %c0_4 = arith.constant 0 : index
    %2 = vector.load %arg2[%c0_2, %c0_3, %c0_4] : memref<1x16x8xf32, #tpu.memory_space<vmem>>, vector<1x16x8xf32>
    %3 = vector.shape_cast %2 : vector<1x16x8xf32> to vector<16x8xf32>
    %c0_5 = arith.constant 0 : index
    %c0_6 = arith.constant 0 : index
    %4 = vector.load %arg3[%c0_5, %c0_6] : memref<4x32xf32, #tpu.memory_space<vmem>>, vector<4x32xf32>
    %c0_7 = arith.constant 0 : index
    %c0_8 = arith.constant 0 : index
    %5 = vector.load %arg4[%c0_7, %c0_8] : memref<32x32xf32, #tpu.memory_space<vmem>>, vector<32x32xf32>
    %c0_9 = arith.constant 0 : index
    %c0_10 = arith.constant 0 : index
    %6 = vector.load %arg5[%c0_9, %c0_10] : memref<4x1xf32, #tpu.memory_space<vmem>>, vector<4x1xf32>
    %c0_11 = arith.constant 0 : index
    %c0_12 = arith.constant 0 : index
    %7 = vector.load %arg6[%c0_11, %c0_12] : memref<32x1xf32, #tpu.memory_space<vmem>>, vector<32x1xf32>
    %cst = arith.constant dense<0.000000e+00> : vector<16x32xf32>
    %8 = tpu.matmul %1, %4, %cst {dimension_numbers = #tpu.dot_dimension_numbers<[1], [0], [0], [1], [0, 0, 1, 1], [], []>} : vector<16x4xf32>, vector<4x32xf32>, vector<16x32xf32> -> vector<16x32xf32>
    %cst_13 = arith.constant dense<0.000000e+00> : vector<8x32xf32>
    %9 = tpu.matmul %3, %8, %cst_13 {dimension_numbers = #tpu.dot_dimension_numbers<[0], [0], [1], [1], [0, 1, 1, 1], [], []>} : vector<16x8xf32>, vector<16x32xf32>, vector<8x32xf32> -> vector<8x32xf32>
    %cst_14 = arith.constant 1.000000e+00 : f32
    %10 = vector.broadcast %cst_14 : f32 to vector<16x1xf32>
    %cst_15 = arith.constant dense<0.000000e+00> : vector<8x1xf32>
    %11 = tpu.matmul %3, %10, %cst_15 {dimension_numbers = #tpu.dot_dimension_numbers<[0], [0], [1], [1], [0, 1, 1, 1], [], []>} : vector<16x8xf32>, vector<16x1xf32>, vector<8x1xf32> -> vector<8x1xf32>
    %12 = tpu.reciprocal %11 {approx = true} : vector<8x1xf32> -> vector<8x1xf32>
    %13 = arith.mulf %11, %12 : vector<8x1xf32>
    %cst_16 = arith.constant 2.000000e+00 : f32
    %14 = vector.broadcast %cst_16 : f32 to vector<8x1xf32>
    %15 = arith.subf %14, %13 : vector<8x1xf32>
    %16 = arith.mulf %12, %15 : vector<8x1xf32>
    %17 = vector.broadcast %16 : vector<8x1xf32> to vector<8x32xf32>
    %18 = arith.mulf %9, %17 : vector<8x32xf32>
    %cst_17 = arith.constant dense<0.000000e+00> : vector<1x8xf32>
    %19 = tpu.matmul %7, %18, %cst_17 {dimension_numbers = #tpu.dot_dimension_numbers<[0], [1], [1], [0], [0, 1, 1, 0], [], []>} : vector<32x1xf32>, vector<8x32xf32>, vector<1x8xf32> -> vector<1x8xf32>
    %cst_18 = arith.constant dense<0.000000e+00> : vector<16x1xf32>
    %20 = tpu.matmul %1, %6, %cst_18 {dimension_numbers = #tpu.dot_dimension_numbers<[1], [0], [0], [1], [0, 0, 1, 1], [], []>} : vector<16x4xf32>, vector<4x1xf32>, vector<16x1xf32> -> vector<16x1xf32>
    %21 = vector.broadcast %19 : vector<1x8xf32> to vector<16x8xf32>
    %22 = vector.broadcast %20 : vector<16x1xf32> to vector<16x8xf32>
    %23 = arith.addf %21, %22 : vector<16x8xf32>
    %cst_19 = arith.constant 1.250000e-01 : f32
    %24 = vector.broadcast %cst_19 : f32 to vector<16x8xf32>
    %25 = arith.mulf %23, %24 : vector<16x8xf32>
    %26 = math.tanh %25 : vector<16x8xf32>
    %cst_20 = arith.constant 8.000000e+00 : f32
    %27 = vector.broadcast %cst_20 : f32 to vector<16x8xf32>
    %28 = arith.mulf %26, %27 : vector<16x8xf32>
    %cst_21 = arith.constant 0.000000e+00 : f32
    %29 = vector.broadcast %cst_21 : f32 to vector<16x8xf32>
    %30 = arith.cmpf oge, %28, %29 : vector<16x8xf32>
    %cst_22 = arith.constant 1.000000e-01 : f32
    %31 = vector.broadcast %cst_22 : f32 to vector<16x8xf32>
    %32 = arith.mulf %31, %28 : vector<16x8xf32>
    %33 = arith.select %30, %28, %32 : vector<16x8xi1>, vector<16x8xf32>
    %34 = math.exp %33 : vector<16x8xf32>
    %35 = arith.mulf %34, %3 : vector<16x8xf32>
    %cst_23 = arith.constant dense<0.000000e+00> : vector<16xf32>
    %36 = vector.multi_reduction <add>, %35, %cst_23 [1] : vector<16x8xf32> to vector<16xf32>
    %37 = vector.shape_cast %36 : vector<16xf32> to vector<16x1xf32>
    %38 = tpu.reciprocal %37 {approx = true} : vector<16x1xf32> -> vector<16x1xf32>
    %39 = arith.mulf %37, %38 : vector<16x1xf32>
    %cst_24 = arith.constant 2.000000e+00 : f32
    %40 = vector.broadcast %cst_24 : f32 to vector<16x1xf32>
    %41 = arith.subf %40, %39 : vector<16x1xf32>
    %42 = arith.mulf %38, %41 : vector<16x1xf32>
    %43 = vector.broadcast %42 : vector<16x1xf32> to vector<16x8xf32>
    %44 = arith.mulf %35, %43 : vector<16x8xf32>
    %cst_25 = arith.constant dense<0.000000e+00> : vector<16x32xf32>
    %45 = tpu.matmul %44, %18, %cst_25 {dimension_numbers = #tpu.dot_dimension_numbers<[1], [0], [0], [1], [0, 0, 1, 1], [], []>} : vector<16x8xf32>, vector<8x32xf32>, vector<16x32xf32> -> vector<16x32xf32>
    %cst_26 = arith.constant dense<0.000000e+00> : vector<16x32xf32>
    %46 = tpu.matmul %45, %5, %cst_26 {dimension_numbers = #tpu.dot_dimension_numbers<[1], [0], [0], [1], [0, 0, 1, 1], [], []>} : vector<16x32xf32>, vector<32x32xf32>, vector<16x32xf32> -> vector<16x32xf32>
    %cst_27 = arith.constant 0.000000e+00 : f32
    %47 = vector.broadcast %cst_27 : f32 to vector<16x32xf32>
    %48 = arith.cmpf oge, %46, %47 : vector<16x32xf32>
    %cst_28 = arith.constant 1.000000e-01 : f32
    %49 = vector.broadcast %cst_28 : f32 to vector<16x32xf32>
    %50 = arith.mulf %49, %46 : vector<16x32xf32>
    %51 = arith.select %48, %46, %50 : vector<16x32xi1>, vector<16x32xf32>
    %c0_29 = arith.constant 0 : index
    %c0_30 = arith.constant 0 : index
    %c0_31 = arith.constant 0 : index
    %52 = vector.load %arg7[%c0_29, %c0_30, %c0_31] : memref<1x16x32xf32, #tpu.memory_space<vmem>>, vector<1x16x32xf32>
    %53 = vector.shape_cast %52 : vector<1x16x32xf32> to vector<16x32xf32>
    %54 = vector.shape_cast %51 : vector<16x32xf32> to vector<1x16x32xf32>
    tpu.vector_store %arg7[%c0_29, %c0_30, %c0_31], %54 {strides = array<i32>} : memref<1x16x32xf32, #tpu.memory_space<vmem>>, vector<1x16x32xf32>,
    return
  }
  func.func @transform_0(%arg0: i32) -> (i32, i32, i32) {
    %c0_i32 = arith.constant 0 : i32
    %c0_i32_0 = arith.constant 0 : i32
    %c0_i32_1 = arith.constant 0 : i32
    return %arg0, %c0_i32, %c0_i32_0 : i32, i32, i32
  }
  func.func @transform_1(%arg0: i32) -> (i32, i32, i32) {
    %c0_i32 = arith.constant 0 : i32
    %c0_i32_0 = arith.constant 0 : i32
    %c0_i32_1 = arith.constant 0 : i32
    return %arg0, %c0_i32, %c0_i32_0 : i32, i32, i32
  }
  func.func @transform_2(%arg0: i32) -> (i32, i32) {
    %c0_i32 = arith.constant 0 : i32
    %c0_i32_0 = arith.constant 0 : i32
    %c0_i32_1 = arith.constant 0 : i32
    return %c0_i32, %c0_i32_0 : i32, i32
  }
  func.func @transform_3(%arg0: i32) -> (i32, i32) {
    %c0_i32 = arith.constant 0 : i32
    %c0_i32_0 = arith.constant 0 : i32
    %c0_i32_1 = arith.constant 0 : i32
    return %c0_i32, %c0_i32_0 : i32, i32
  }
  func.func @transform_4(%arg0: i32) -> (i32, i32) {
    %c0_i32 = arith.constant 0 : i32
    %c0_i32_0 = arith.constant 0 : i32
    %c0_i32_1 = arith.constant 0 : i32
    return %c0_i32, %c0_i32_0 : i32, i32
  }
  func.func @transform_5(%arg0: i32) -> (i32, i32) {
    %c0_i32 = arith.constant 0 : i32
    %c0_i32_0 = arith.constant 0 : i32
    %c0_i32_1 = arith.constant 0 : i32
    return %c0_i32, %c0_i32_0 : i32, i32
  }
  func.func @transform_6(%arg0: i32) -> (i32, i32, i32) {
    %c0_i32 = arith.constant 0 : i32
    %c0_i32_0 = arith.constant 0 : i32
    %c0_i32_1 = arith.constant 0 : i32
    return %arg0, %c0_i32, %c0_i32_0 : i32, i32, i32
  }
}

</mosaic_0001>

<llo_original>
// kernel: tpu_custom_call.1
$region0: #{tpu_custom_call.1}
  #allocation0 [shape = 'u32[]', space=smem, size = 0x4, offset = 0x4, fixed_abs, tag = 'smem constant byte address 0x4 - core index']
  #allocation1 [shape = 'u32[144,128]{1,0:T(1,128)}', space=vmem, size = 0x12000, scoped, tag = 'internal scratch']
  %s0 = inlined_call_operand.vmem [shape: f32[2,16,4], index: 0, kind: input, shape index: {}]
  %s1 = inlined_call_operand.vmem [shape: f32[2,16,8], index: 1, kind: input, shape index: {}]
  %s2 = inlined_call_operand.vmem [shape: f32[4,32], index: 2, kind: input, shape index: {}]
  %s3 = inlined_call_operand.vmem [shape: f32[32,32], index: 3, kind: input, shape index: {}]
  %s4 = inlined_call_operand.vmem [shape: f32[4,1], index: 4, kind: input, shape index: {}]
  %s5 = inlined_call_operand.vmem [shape: f32[32,1], index: 5, kind: input, shape index: {}]
  %s6 = inlined_call_operand.hbm [shape: f32[2,16,32], index: 6, kind: output, shape index: {}]
  %s7 = sld [smem:[#allocation0]]
  $region57: #{tpu_custom_call.1} parent=0
    _
  %s9 = ssub.s32 1, %s7
  %s10 = scalar_select 0, %s9, %s7
  $region1: #{tpu_custom_call.1} parent=0
    #allocation2 [shape = 'u8[16384]{0}', space=vmem, size = 0x4000, scoped, tag = 'output window, operand 0']
    #allocation3 [shape = 's32[2]{0}', space=sflag, size = 0x8, scoped, tag = 'scoped memory for tpu_custom_call.1']
    %11 = vsyncpa [#allocation3], 0
    %s12 = scalar_lea.sflag [#allocation3], 1
    %13 = vsyncpa %s12, 0
    loop: start=0, step=1, limit=4
    $region2: #{tpu_custom_call.1} parent=1 // loop_pre_header
      _
    $region3: #{tpu_custom_call.1} parent=1 // loop_header
      %s15 = sphi 0, %s19
      %p16 = scmp.ge.s32.totalorder %s15, 4
      %s25 = sphi 0, %s27
      %s28 = sphi 0, %s25
      %s29 = sphi 0, %s28
      %s45 = sphi 0, %s29
      %s51 = sphi 0, %s53
      %s54 = sphi 0, %s51
      %s55 = sphi 0, %s54
      %s71 = sphi 0, %s55
      %s75 = sphi 0, %s75
      %s77 = sphi 0, %s75
      %s78 = sphi 0, %s77
      %s92 = sphi 0, %s78
      %s96 = sphi 0, %s96
      %s98 = sphi 0, %s96
      %s99 = sphi 0, %s98
      %s113 = sphi 0, %s99
      %s117 = sphi 0, %s117
      %s119 = sphi 0, %s117
      %s120 = sphi 0, %s119
      %s134 = sphi 0, %s120
      %s138 = sphi 0, %s138
      %s140 = sphi 0, %s138
      %s141 = sphi 0, %s140
      %s155 = sphi 0, %s141
      %s161 = sphi 0, %s163
      %s164 = sphi 0, %s161
      %s165 = sphi 0, %s164
      %s181 = sphi 0, %s165
    $region4: #{tpu_custom_call.1} parent=1 // loop_header_branch
      %18 = sbr.rel (%p16) target = $region8
    $region5: #{tpu_custom_call.1} parent=1 // loop_body
      %s20 = ssub.s32 %s15, 1
      %s21 = ssub.s32 %s15, 2
      %s22 = sadd.s32 %s15, 1
      %s23 = ssub.s32 %s15, %s22
      %p24 = scmp.eq.s32.totalorder %s23, 0
      %s26 = sadd.s32 %s25, 1
      %s27 = scalar_select %p24, %s25, %s26
      %p30 = pneg %p24
      %p31 = scmp.eq.s32.totalorder %s15, 1
      %p32 = por %p30, %p31
      %p33 = scmp.ne.s32.totalorder %s25, %s28
      %p34 = scmp.eq.s32.totalorder %s15, 0
      %p35 = por %p33, %p34
      %p36 = scmp.ne.s32.totalorder %s25, %s28
      %p37 = scmp.eq.s32.totalorder %s20, 1
      %p38 = por %p36, %p37
      %p39 = scmp.ne.s32.totalorder %s28, %s29
      %p40 = scmp.eq.s32.totalorder %s20, 0
      %p41 = por %p39, %p40
      %p42 = scmp.ne.s32.totalorder %s28, %s29
      %p43 = scmp.eq.s32.totalorder %s21, 1
      %p44 = por %p42, %p43
      %p46 = scmp.ne.s32.totalorder %s29, %s45
      %p47 = scmp.eq.s32.totalorder %s21, 0
      %p48 = por %p46, %p47
      %s49 = ssub.s32 %s15, %s22
      %p50 = scmp.eq.s32.totalorder %s49, 0
      %s52 = sadd.s32 %s51, 1
      %s53 = scalar_select %p50, %s51, %s52
      %p56 = pneg %p50
      %p57 = scmp.eq.s32.totalorder %s15, 1
      %p58 = por %p56, %p57
      %p59 = scmp.ne.s32.totalorder %s51, %s54
      %p60 = scmp.eq.s32.totalorder %s15, 0
      %p61 = por %p59, %p60
      %p62 = scmp.ne.s32.totalorder %s51, %s54
      %p63 = scmp.eq.s32.totalorder %s20, 1
      %p64 = por %p62, %p63
      %p65 = scmp.ne.s32.totalorder %s54, %s55
      %p66 = scmp.eq.s32.totalorder %s20, 0
      %p67 = por %p65, %p66
      %p68 = scmp.ne.s32.totalorder %s54, %s55
      %p69 = scmp.eq.s32.totalorder %s21, 1
      %p70 = por %p68, %p69
      %p72 = scmp.ne.s32.totalorder %s55, %s71
      %p73 = scmp.eq.s32.totalorder %s21, 0
      %p74 = por %p72, %p73
      %s76 = sadd.s32 %s75, 1
      %p79 = scmp.eq.s32.totalorder %s15, 1
      %p80 = scmp.ne.s32.totalorder %s75, %s77
      %p81 = scmp.eq.s32.totalorder %s15, 0
      %p82 = por %p80, %p81
      %p83 = scmp.ne.s32.totalorder %s75, %s77
      %p84 = scmp.eq.s32.totalorder %s20, 1
      %p85 = por %p83, %p84
      %p86 = scmp.ne.s32.totalorder %s77, %s78
      %p87 = scmp.eq.s32.totalorder %s20, 0
      %p88 = por %p86, %p87
      %p89 = scmp.ne.s32.totalorder %s77, %s78
      %p90 = scmp.eq.s32.totalorder %s21, 1
      %p91 = por %p89, %p90
      %p93 = scmp.ne.s32.totalorder %s78, %s92
      %p94 = scmp.eq.s32.totalorder %s21, 0
      %p95 = por %p93, %p94
      %s97 = sadd.s32 %s96, 1
      %p100 = scmp.eq.s32.totalorder %s15, 1
      %p101 = scmp.ne.s32.totalorder %s96, %s98
      %p102 = scmp.eq.s32.totalorder %s15, 0
      %p103 = por %p101, %p102
      %p104 = scmp.ne.s32.totalorder %s96, %s98
      %p105 = scmp.eq.s32.totalorder %s20, 1
      %p106 = por %p104, %p105
      %p107 = scmp.ne.s32.totalorder %s98, %s99
      %p108 = scmp.eq.s32.totalorder %s20, 0
      %p109 = por %p107, %p108
      %p110 = scmp.ne.s32.totalorder %s98, %s99
      %p111 = scmp.eq.s32.totalorder %s21, 1
      %p112 = por %p110, %p111
      %p114 = scmp.ne.s32.totalorder %s99, %s113
      %p115 = scmp.eq.s32.totalorder %s21, 0
      %p116 = por %p114, %p115
      %s118 = sadd.s32 %s117, 1
      %p121 = scmp.eq.s32.totalorder %s15, 1
      %p122 = scmp.ne.s32.totalorder %s117, %s119
      %p123 = scmp.eq.s32.totalorder %s15, 0
      %p124 = por %p122, %p123
      %p125 = scmp.ne.s32.totalorder %s117, %s119
      %p126 = scmp.eq.s32.totalorder %s20, 1
      %p127 = por %p125, %p126
      %p128 = scmp.ne.s32.totalorder %s119, %s120
      %p129 = scmp.eq.s32.totalorder %s20, 0
      %p130 = por %p128, %p129
      %p131 = scmp.ne.s32.totalorder %s119, %s120
      %p132 = scmp.eq.s32.totalorder %s21, 1
      %p133 = por %p131, %p132
      %p135 = scmp.ne.s32.totalorder %s120, %s134
      %p136 = scmp.eq.s32.totalorder %s21, 0
      %p137 = por %p135, %p136
      %s139 = sadd.s32 %s138, 1
      %p142 = scmp.eq.s32.totalorder %s15, 1
      %p143 = scmp.ne.s32.totalorder %s138, %s140
      %p144 = scmp.eq.s32.totalorder %s15, 0
      %p145 = por %p143, %p144
      %p146 = scmp.ne.s32.totalorder %s138, %s140
      %p147 = scmp.eq.s32.totalorder %s20, 1
      %p148 = por %p146, %p147
      %p149 = scmp.ne.s32.totalorder %s140, %s141
      %p150 = scmp.eq.s32.totalorder %s20, 0
      %p151 = por %p149, %p150
      %p152 = scmp.ne.s32.totalorder %s140, %s141
      %p153 = scmp.eq.s32.totalorder %s21, 1
      %p154 = por %p152, %p153
      %p156 = scmp.ne.s32.totalorder %s141, %s155
      %p157 = scmp.eq.s32.totalorder %s21, 0
      %p158 = por %p156, %p157
      %s159 = ssub.s32 %s15, %s22
      %p160 = scmp.eq.s32.totalorder %s159, 0
      %s162 = sadd.s32 %s161, 1
      %s163 = scalar_select %p160, %s161, %s162
      %p166 = pneg %p160
      %p167 = scmp.eq.s32.totalorder %s15, 1
      %p168 = por %p166, %p167
      %p169 = scmp.ne.s32.totalorder %s161, %s164
      %p170 = scmp.eq.s32.totalorder %s15, 0
      %p171 = por %p169, %p170
      %p172 = scmp.ne.s32.totalorder %s161, %s164
      %p173 = scmp.eq.s32.totalorder %s20, 1
      %p174 = por %p172, %p173
      %p175 = scmp.ne.s32.totalorder %s164, %s165
      %p176 = scmp.eq.s32.totalorder %s20, 0
      %p177 = por %p175, %p176
      %p178 = scmp.ne.s32.totalorder %s164, %s165
      %p179 = scmp.eq.s32.totalorder %s21, 1
      %p180 = por %p178, %p179
      %p182 = scmp.ne.s32.totalorder %s165, %s181
      %p183 = scmp.eq.s32.totalorder %s21, 0
      %p184 = por %p182, %p183
      %p185 = scmp.le.s32.totalorder 1, %s15
      %p186 = scmp.lt.s32.totalorder %s15, 3
      %p187 = pnand %p185, %p186
      %p188 = pneg %p187
      // Predicated region
      $region9: #{tpu_custom_call.1} parent=5 // pred_check
        _
      $region10: #{tpu_custom_call.1} parent=5 // pred_check_branch
        %190 = sbr.rel (%p187) target = $region12
      $region11: #{tpu_custom_call.1} parent=5 // pred_region
        %s191 = ssub.s32 %s15, 1
        // Predicated region
        $region13: #{tpu_custom_call.1} parent=11 // pred_check
          %p192 = pneg %p88
        $region14: #{tpu_custom_call.1} parent=11 // pred_check_branch
          %194 = sbr.rel (%p192) target = $region16
        $region15: #{tpu_custom_call.1} parent=11 // pred_region
          _
        $region16: #{tpu_custom_call.1} parent=11 // pred_fallthru
          _
        // Predicated region
        $region17: #{tpu_custom_call.1} parent=11 // pred_check
          %p195 = pneg %p109
        $region18: #{tpu_custom_call.1} parent=11 // pred_check_branch
          %197 = sbr.rel (%p195) target = $region20
        $region19: #{tpu_custom_call.1} parent=11 // pred_region
          _
        $region20: #{tpu_custom_call.1} parent=11 // pred_fallthru
          _
        // Predicated region
        $region21: #{tpu_custom_call.1} parent=11 // pred_check
          %p198 = pneg %p130
        $region22: #{tpu_custom_call.1} parent=11 // pred_check_branch
          %200 = sbr.rel (%p198) target = $region24
        $region23: #{tpu_custom_call.1} parent=11 // pred_region
          _
        $region24: #{tpu_custom_call.1} parent=11 // pred_fallthru
          _
        // Predicated region
        $region25: #{tpu_custom_call.1} parent=11 // pred_check
          %p201 = pneg %p151
        $region26: #{tpu_custom_call.1} parent=11 // pred_check_branch
          %203 = sbr.rel (%p201) target = $region28
        $region27: #{tpu_custom_call.1} parent=11 // pred_region
          _
        $region28: #{tpu_custom_call.1} parent=11 // pred_fallthru
          _
      $region12: #{tpu_custom_call.1} parent=5 // pred_fallthru
        _
      %p204 = scmp.lt.s32.totalorder %s15, 2
      // Predicated region
      $region29: #{tpu_custom_call.1} parent=5 // pred_check
        %p205 = pneg %p204
      $region30: #{tpu_custom_call.1} parent=5 // pred_check_branch
        %207 = sbr.rel (%p205) target = $region32
      $region31: #{tpu_custom_call.1} parent=5 // pred_region
        // Predicated region
        $region33: #{tpu_custom_call.1} parent=31 // pred_check
          %p208 = pneg %p35
        $region34: #{tpu_custom_call.1} parent=31 // pred_check_branch
          %210 = sbr.rel (%p208) target = $region36
        $region35: #{tpu_custom_call.1} parent=31 // pred_region
          %p211 = scmp.lt.s32.totalorder %s15, 1
          %s212 = scalar_select %p211, %s15, 1
          %s213 = smul.addr %s212, 2
          %s214 = smul.addr %s213, 8
          %s215 = scalar_lea.vmem %s0, %s214
        $region36: #{tpu_custom_call.1} parent=31 // pred_fallthru
          _
        // Predicated region
        $region37: #{tpu_custom_call.1} parent=31 // pred_check
          %p216 = pneg %p61
        $region38: #{tpu_custom_call.1} parent=31 // pred_check_branch
          %218 = sbr.rel (%p216) target = $region40
        $region39: #{tpu_custom_call.1} parent=31 // pred_region
          %p219 = scmp.lt.s32.totalorder %s15, 1
          %s220 = scalar_select %p219, %s15, 1
          %s221 = smul.addr %s220, 2
          %s222 = smul.addr %s221, 8
          %s223 = scalar_lea.vmem %s1, %s222
        $region40: #{tpu_custom_call.1} parent=31 // pred_fallthru
          _
      $region32: #{tpu_custom_call.1} parent=5 // pred_fallthru
        _
      %p224 = scmp.le.s32.totalorder 1, %s15
      %p225 = scmp.lt.s32.totalorder %s15, 3
      %p226 = pnand %p224, %p225
      %p227 = pneg %p226
      // Predicated region
      $region41: #{tpu_custom_call.1} parent=5 // pred_check
        _
      $region42: #{tpu_custom_call.1} parent=5 // pred_check_branch
        %229 = sbr.rel (%p226) target = $region44
      $region43: #{tpu_custom_call.1} parent=5 // pred_region
        %s230 = ssub.s32 %s15, 1
        %p231 = scmp.lt.s32.totalorder %s20, 1
        %s232 = scalar_select %p231, %s20, 1
        %s233 = smul.addr %s232, 2
        %s234 = smul.addr %s233, 8
        %s235 = scalar_lea.vmem %s0, %s234
        %p236 = pneg %p41
        %p237 = pneg %p38
        %p238 = scmp.lt.s32.totalorder %s20, 1
        %s239 = scalar_select %p238, %s20, 1
        %s240 = smul.addr %s239, 2
        %s241 = smul.addr %s240, 8
        %s242 = scalar_lea.vmem %s1, %s241
        %p243 = pneg %p67
        %p244 = pneg %p64
        %p245 = pneg %p88
        %p246 = pneg %p85
        %p247 = pneg %p109
        %p248 = pneg %p106
        %p249 = pneg %p130
        %p250 = pneg %p127
        %p251 = pneg %p151
        %p252 = pneg %p148
        %p253 = pneg %p177
        %p254 = pneg %p174
        %s255 = sand.u32 %s164, 1
        %s256 = scalar_lea.sflag [#allocation3], %s255
        %s257 = sand.u32 %s164, 1
        %s258 = smul.addr %s257, 16
        %s259 = scalar_lea.vmem [#allocation2], %s258
        %p260 = scmp.lt.s32.totalorder %s20, 1
        %s261 = scalar_select %p260, %s20, 1
        %s262 = smul.addr %s261, 2
        %s263 = smul.addr %s262, 8
        %s264 = scalar_lea.vmem %s0, %s263
        %p265 = scmp.lt.s32.totalorder %s20, 1
        %s266 = scalar_select %p265, %s20, 1
        %s267 = smul.addr %s266, 2
        %s268 = smul.addr %s267, 8
        %s269 = scalar_lea.vmem %s1, %s268
        %v270 = vld [vmem:[%s264] sm:$0xff]
        %v271 = vld [vmem:[%s264 + $0x8] sm:$0xff]
        %v272 = vld [vmem:[%s269] sm:$0xff]
        %v273 = vld [vmem:[%s269 + $0x8] sm:$0xff]
        %v274 = vld [vmem:[%s2] sm:$0xf]
        %v275 = vld [vmem:[%s3] sm:$0xff]
        %v276 = vld [vmem:[%s3 + $0x8] sm:$0xff]
        %v277 = vld [vmem:[%s3 + $0x10] sm:$0xff]
        %v278 = vld [vmem:[%s3 + $0x18] sm:$0xff]
        %v279 = vld [vmem:[%s4] sm:$0xf]
        %v280 = vld [vmem:[%s5] sm:$0xff]
        %v281 = vld [vmem:[%s5 + $0x8] sm:$0xff]
        %v282 = vld [vmem:[%s5 + $0x10] sm:$0xff]
        %v283 = vld [vmem:[%s5 + $0x18] sm:$0xff]
        %vm284 = vcmask 31744
        %v286 = vsel %vm284, %v270, 0
        %v289 = vsel %vm284, %v271, 0
        %vm291 = vcmask 1043456
        %v293 = vsel %vm291, %v274, 0
        %295 = vmatprep.subr.mxu0 0.0
        %296 = vmatpush1.msra.mxu0 0.0
        %297 = vmatprep.subr.mxu0 0.0
        %298 = vmatpush1.msra.mxu0 0.0
        %299 = vmatprep.subr.mxu0 0.0
        %300 = vmatpush1.msra.mxu0 0.0
        %301 = vmatprep.subr.mxu0 0.0
        %302 = vmatpush1.msra.mxu0 0.0
        %303 = vmatprep.subr.mxu0 0.0
        %304 = vmatpush1.msra.mxu0 0.0
        %305 = vmatprep.subr.mxu0 0.0
        %306 = vmatpush1.msra.mxu0 0.0
        %307 = vmatprep.subr.mxu0 0.0
        %308 = vmatpush1.msra.mxu0 0.0
        %309 = vmatprep.subr.mxu0 0.0
        %310 = vmatpush1.msra.mxu0 0.0
        %311 = vmatprep.subr.mxu0 0.0
        %312 = vmatpush1.msra.mxu0 0.0
        %313 = vmatprep.subr.mxu0 0.0
        %314 = vmatpush1.msra.mxu0 0.0
        %315 = vmatprep.subr.mxu0 0.0
        %316 = vmatpush1.msra.mxu0 0.0
        %317 = vmatprep.subr.mxu0 0.0
        %318 = vmatpush1.msra.mxu0 0.0
        %319 = vmatprep.subr.mxu0 0.0
        %320 = vmatpush1.msra.mxu0 0.0
        %321 = vmatprep.subr.mxu0 0.0
        %322 = vmatpush1.msra.mxu0 0.0
        %323 = vmatprep.subr.mxu0 0.0
        %324 = vmatpush1.msra.mxu0 0.0
        %325 = vmatprep.subr.mxu0 0.0
        %326 = vmatpush1.msra.mxu0 %v293
        %327 = vmatprep.subr.mxu0 0.0
        %328 = vmatpush2.msra.mxu0 0.0
        %329 = vmatprep.subr.mxu0 0.0
        %330 = vmatpush2.msra.mxu0 0.0
        %331 = vmatprep.subr.mxu0 0.0
        %332 = vmatpush2.msra.mxu0 0.0
        %333 = vmatprep.subr.mxu0 0.0
        %334 = vmatpush2.msra.mxu0 0.0
        %335 = vmatprep.subr.mxu0 0.0
        %336 = vmatpush2.msra.mxu0 0.0
        %337 = vmatprep.subr.mxu0 0.0
        %338 = vmatpush2.msra.mxu0 0.0
        %339 = vmatprep.subr.mxu0 0.0
        %340 = vmatpush2.msra.mxu0 0.0
        %341 = vmatprep.subr.mxu0 0.0
        %342 = vmatpush2.msra.mxu0 0.0
        %343 = vmatprep.subr.mxu0 0.0
        %344 = vmatpush2.msra.mxu0 0.0
        %345 = vmatprep.subr.mxu0 0.0
        %346 = vmatpush2.msra.mxu0 0.0
        %347 = vmatprep.subr.mxu0 0.0
        %348 = vmatpush2.msra.mxu0 0.0
        %349 = vmatprep.subr.mxu0 0.0
        %350 = vmatpush2.msra.mxu0 0.0
        %351 = vmatprep.subr.mxu0 0.0
        %352 = vmatpush2.msra.mxu0 0.0
        %353 = vmatprep.subr.mxu0 0.0
        %354 = vmatpush2.msra.mxu0 0.0
        %355 = vmatprep.subr.mxu0 0.0
        %356 = vmatpush2.msra.mxu0 0.0
        %357 = vmatprep.subr.mxu0 0.0
        %358 = vmatpush2.msra.mxu0 0.0
        %359 = vmatprep.mubr.f32.mxu0 0.0
        %360 = vmatmul.mubr.f32.gmra.mxu0 %v286
        %v361 = vpop.f32.mrf.mxu0
        %v362 = vadd.f32 0.0, %v361
        %v363 = vpop.f32.mrf.mxu0
        %364 = vmatprep.mubr.f32.mxu0 0.0
        %365 = vmatmul.mubr.f32.gmra.mxu0 %v289
        %v366 = vpop.f32.mrf.mxu0
        %v367 = vadd.f32 0.0, %v366
        %v368 = vpop.f32.mrf.mxu0
        %369 = vdwg.mxu0
        %370 = vxpose.xlu0.b32.start [1/16] %v272, 128
        %371 = vxpose.xlu0.b32.cont [2/16] %v273, 128
        %372 = vxpose.xlu0.b32.cont [3/16] 0.0, 128
        %373 = vxpose.xlu0.b32.cont [4/16] 0.0, 128
        %374 = vxpose.xlu0.b32.cont [5/16] 0.0, 128
        %375 = vxpose.xlu0.b32.cont [6/16] 0.0, 128
        %376 = vxpose.xlu0.b32.cont [7/16] 0.0, 128
        %377 = vxpose.xlu0.b32.cont [8/16] 0.0, 128
        %378 = vxpose.xlu0.b32.cont [9/16] 0.0, 128
        %379 = vxpose.xlu0.b32.cont [10/16] 0.0, 128
        %380 = vxpose.xlu0.b32.cont [11/16] 0.0, 128
        %381 = vxpose.xlu0.b32.cont [12/16] 0.0, 128
        %382 = vxpose.xlu0.b32.cont [13/16] 0.0, 128
        %383 = vxpose.xlu0.b32.cont [14/16] 0.0, 128
        %384 = vxpose.xlu0.b32.cont [15/16] 0.0, 128
        %385 = vxpose.xlu0.b32.end [16/16] 0.0, 128
        %v386 = vpop.trf.xlu0
        %v387 = vpop.trf.xlu0
        %v388 = vpop.trf.xlu0
        %v389 = vpop.trf.xlu0
        %v390 = vpop.trf.xlu0
        %v391 = vpop.trf.xlu0
        %v392 = vpop.trf.xlu0
        %v393 = vpop.trf.xlu0
        %v394 = vpop.trf.xlu0
        %v395 = vpop.trf.xlu0
        %v396 = vpop.trf.xlu0
        %v397 = vpop.trf.xlu0
        %v398 = vpop.trf.xlu0
        %v399 = vpop.trf.xlu0
        %v400 = vpop.trf.xlu0
        %v401 = vpop.trf.xlu0
        %vm402 = vcmask 130048
        %v404 = vsel %vm402, %v386, 0
        %406 = vmatprep.subr.mxu0 0.0
        %407 = vmatpush1.msra.mxu0 0.0
        %408 = vmatprep.subr.mxu0 0.0
        %409 = vmatpush1.msra.mxu0 0.0
        %410 = vmatprep.subr.mxu0 0.0
        %411 = vmatpush1.msra.mxu0 0.0
        %412 = vmatprep.subr.mxu0 0.0
        %413 = vmatpush1.msra.mxu0 0.0
        %414 = vmatprep.subr.mxu0 0.0
        %415 = vmatpush1.msra.mxu0 0.0
        %416 = vmatprep.subr.mxu0 0.0
        %417 = vmatpush1.msra.mxu0 0.0
        %418 = vmatprep.subr.mxu0 0.0
        %419 = vmatpush1.msra.mxu0 0.0
        %420 = vmatprep.subr.mxu0 0.0
        %421 = vmatpush1.msra.mxu0 0.0
        %422 = vmatprep.subr.mxu0 0.0
        %423 = vmatpush1.msra.mxu0 0.0
        %424 = vmatprep.subr.mxu0 0.0
        %425 = vmatpush1.msra.mxu0 0.0
        %426 = vmatprep.subr.mxu0 0.0
        %427 = vmatpush1.msra.mxu0 0.0
        %428 = vmatprep.subr.mxu0 0.0
        %429 = vmatpush1.msra.mxu0 0.0
        %430 = vmatprep.subr.mxu0 0.0
        %431 = vmatpush1.msra.mxu0 0.0
        %432 = vmatprep.subr.mxu0 0.0
        %433 = vmatpush1.msra.mxu0 0.0
        %434 = vmatprep.subr.mxu0 0.0
        %435 = vmatpush1.msra.mxu0 %v367
        %436 = vmatprep.subr.mxu0 0.0
        %437 = vmatpush1.msra.mxu0 %v362
        %438 = vmatprep.subr.mxu0 0.0
        %439 = vmatpush2.msra.mxu0 0.0
        %440 = vmatprep.subr.mxu0 0.0
        %441 = vmatpush2.msra.mxu0 0.0
        %442 = vmatprep.subr.mxu0 0.0
        %443 = vmatpush2.msra.mxu0 0.0
        %444 = vmatprep.subr.mxu0 0.0
        %445 = vmatpush2.msra.mxu0 0.0
        %446 = vmatprep.subr.mxu0 0.0
        %447 = vmatpush2.msra.mxu0 0.0
        %448 = vmatprep.subr.mxu0 0.0
        %449 = vmatpush2.msra.mxu0 0.0
        %450 = vmatprep.subr.mxu0 0.0
        %451 = vmatpush2.msra.mxu0 0.0
        %452 = vmatprep.subr.mxu0 0.0
        %453 = vmatpush2.msra.mxu0 0.0
        %454 = vmatprep.subr.mxu0 0.0
        %455 = vmatpush2.msra.mxu0 0.0
        %456 = vmatprep.subr.mxu0 0.0
        %457 = vmatpush2.msra.mxu0 0.0
        %458 = vmatprep.subr.mxu0 0.0
        %459 = vmatpush2.msra.mxu0 0.0
        %460 = vmatprep.subr.mxu0 0.0
        %461 = vmatpush2.msra.mxu0 0.0
        %462 = vmatprep.subr.mxu0 0.0
        %463 = vmatpush2.msra.mxu0 0.0
        %464 = vmatprep.subr.mxu0 0.0
        %465 = vmatpush2.msra.mxu0 0.0
        %466 = vmatprep.subr.mxu0 0.0
        %467 = vmatpush2.msra.mxu0 0.0
        %468 = vmatprep.subr.mxu0 0.0
        %469 = vmatpush2.msra.mxu0 0.0
        %470 = vmatprep.mubr.f32.mxu0 0.0
        %471 = vmatmul.mubr.f32.gmra.mxu0 %v404
        %v472 = vpop.f32.mrf.mxu0
        %v473 = vadd.f32 0.0, %v472
        %v474 = vpop.f32.mrf.mxu0
        %475 = vdwg.mxu0
        %476 = vmatprep.subr.mxu0 0.0
        %477 = vmatpush1.msra.mxu0 0.0
        %478 = vmatprep.subr.mxu0 0.0
        %479 = vmatpush1.msra.mxu0 0.0
        %480 = vmatprep.subr.mxu0 0.0
        %481 = vmatpush1.msra.mxu0 0.0
        %482 = vmatprep.subr.mxu0 0.0
        %483 = vmatpush1.msra.mxu0 0.0
        %484 = vmatprep.subr.mxu0 0.0
        %485 = vmatpush1.msra.mxu0 0.0
        %486 = vmatprep.subr.mxu0 0.0
        %487 = vmatpush1.msra.mxu0 0.0
        %488 = vmatprep.subr.mxu0 0.0
        %489 = vmatpush1.msra.mxu0 0.0
        %490 = vmatprep.subr.mxu0 0.0
        %491 = vmatpush1.msra.mxu0 0.0
        %492 = vmatprep.subr.mxu0 0.0
        %493 = vmatpush1.msra.mxu0 0.0
        %494 = vmatprep.subr.mxu0 0.0
        %495 = vmatpush1.msra.mxu0 0.0
        %496 = vmatprep.subr.mxu0 0.0
        %497 = vmatpush1.msra.mxu0 0.0
        %498 = vmatprep.subr.mxu0 0.0
        %499 = vmatpush1.msra.mxu0 0.0
        %500 = vmatprep.subr.mxu0 0.0
        %501 = vmatpush1.msra.mxu0 0.0
        %502 = vmatprep.subr.mxu0 0.0
        %503 = vmatpush1.msra.mxu0 0.0
        %504 = vmatprep.subr.mxu0 0.0
        %505 = vmatpush1.msra.mxu0 1.0
        %506 = vmatprep.subr.mxu0 0.0
        %507 = vmatpush1.msra.mxu0 1.0
        %508 = vmatprep.subr.mxu0 0.0
        %509 = vmatpush2.msra.mxu0 0.0
        %510 = vmatprep.subr.mxu0 0.0
        %511 = vmatpush2.msra.mxu0 0.0
        %512 = vmatprep.subr.mxu0 0.0
        %513 = vmatpush2.msra.mxu0 0.0
        %514 = vmatprep.subr.mxu0 0.0
        %515 = vmatpush2.msra.mxu0 0.0
        %516 = vmatprep.subr.mxu0 0.0
        %517 = vmatpush2.msra.mxu0 0.0
        %518 = vmatprep.subr.mxu0 0.0
        %519 = vmatpush2.msra.mxu0 0.0
        %520 = vmatprep.subr.mxu0 0.0
        %521 = vmatpush2.msra.mxu0 0.0
        %522 = vmatprep.subr.mxu0 0.0
        %523 = vmatpush2.msra.mxu0 0.0
        %524 = vmatprep.subr.mxu0 0.0
        %525 = vmatpush2.msra.mxu0 0.0
        %526 = vmatprep.subr.mxu0 0.0
        %527 = vmatpush2.msra.mxu0 0.0
        %528 = vmatprep.subr.mxu0 0.0
        %529 = vmatpush2.msra.mxu0 0.0
        %530 = vmatprep.subr.mxu0 0.0
        %531 = vmatpush2.msra.mxu0 0.0
        %532 = vmatprep.subr.mxu0 0.0
        %533 = vmatpush2.msra.mxu0 0.0
        %534 = vmatprep.subr.mxu0 0.0
        %535 = vmatpush2.msra.mxu0 0.0
        %536 = vmatprep.subr.mxu0 0.0
        %537 = vmatpush2.msra.mxu0 0.0
        %538 = vmatprep.subr.mxu0 0.0
        %539 = vmatpush2.msra.mxu0 0.0
        %540 = vmatprep.mubr.f32.mxu0 0.0
        %541 = vmatmul.mubr.f32.gmra.mxu0 %v404
        %v542 = vpop.f32.mrf.mxu0
        %v543 = vadd.f32 0.0, %v542
        %v544 = vpop.f32.mrf.mxu0
        %545 = vdwg.mxu0
        %v546 = vrcp.pop %v543
        %v547 = vmul.f32 %v543, %v546
        %v548 = vsub.f32 2.0, %v547
        %v549 = vmul.f32 %v546, %v548
        %551 = vset.pattern.permute.xlu0 0
        %552 = vperm.xlu0 %551, %v549
        %v553 = vpop.permute.xlu0 %552
        %v555 = vmul.f32 %v473, %v553
        %556 = vxpose.xlu0.b32.start [1/16] %v280, 128
        %557 = vxpose.xlu0.b32.cont [2/16] %v281, 128
        %558 = vxpose.xlu0.b32.cont [3/16] %v282, 128
        %559 = vxpose.xlu0.b32.cont [4/16] %v283, 128
        %560 = vxpose.xlu0.b32.cont [5/16] 0.0, 128
        %561 = vxpose.xlu0.b32.cont [6/16] 0.0, 128
        %562 = vxpose.xlu0.b32.cont [7/16] 0.0, 128
        %563 = vxpose.xlu0.b32.cont [8/16] 0.0, 128
        %564 = vxpose.xlu0.b32.cont [9/16] 0.0, 128
        %565 = vxpose.xlu0.b32.cont [10/16] 0.0, 128
        %566 = vxpose.xlu0.b32.cont [11/16] 0.0, 128
        %567 = vxpose.xlu0.b32.cont [12/16] 0.0, 128
        %568 = vxpose.xlu0.b32.cont [13/16] 0.0, 128
        %569 = vxpose.xlu0.b32.cont [14/16] 0.0, 128
        %570 = vxpose.xlu0.b32.cont [15/16] 0.0, 128
        %571 = vxpose.xlu0.b32.end [16/16] 0.0, 128
        %v572 = vpop.trf.xlu0
        %v573 = vpop.trf.xlu0
        %v574 = vpop.trf.xlu0
        %v575 = vpop.trf.xlu0
        %v576 = vpop.trf.xlu0
        %v577 = vpop.trf.xlu0
        %v578 = vpop.trf.xlu0
        %v579 = vpop.trf.xlu0
        %v580 = vpop.trf.xlu0
        %v581 = vpop.trf.xlu0
        %v582 = vpop.trf.xlu0
        %v583 = vpop.trf.xlu0
        %v584 = vpop.trf.xlu0
        %v585 = vpop.trf.xlu0
        %v586 = vpop.trf.xlu0
        %v587 = vpop.trf.xlu0
        %vm588 = vcmask 261120
        %v590 = vsel %vm588, %v572, 0
        %v593 = vsel %vm588, %v555, 0
        %595 = vmatprep.subr.mxu0 0.0
        %596 = vmatpush1.xpose.msra.mxu0 0.0
        %597 = vmatprep.subr.mxu0 0.0
        %598 = vmatpush1.xpose.msra.mxu0 0.0
        %599 = vmatprep.subr.mxu0 0.0
        %600 = vmatpush1.xpose.msra.mxu0 0.0
        %601 = vmatprep.subr.mxu0 0.0
        %602 = vmatpush1.xpose.msra.mxu0 0.0
        %603 = vmatprep.subr.mxu0 0.0
        %604 = vmatpush1.xpose.msra.mxu0 0.0
        %605 = vmatprep.subr.mxu0 0.0
        %606 = vmatpush1.xpose.msra.mxu0 0.0
        %607 = vmatprep.subr.mxu0 0.0
        %608 = vmatpush1.xpose.msra.mxu0 0.0
        %609 = vmatprep.subr.mxu0 0.0
        %610 = vmatpush1.xpose.msra.mxu0 0.0
        %611 = vmatprep.subr.mxu0 0.0
        %612 = vmatpush1.xpose.msra.mxu0 0.0
        %613 = vmatprep.subr.mxu0 0.0
        %614 = vmatpush1.xpose.msra.mxu0 0.0
        %615 = vmatprep.subr.mxu0 0.0
        %616 = vmatpush1.xpose.msra.mxu0 0.0
        %617 = vmatprep.subr.mxu0 0.0
        %618 = vmatpush1.xpose.msra.mxu0 0.0
        %619 = vmatprep.subr.mxu0 0.0
        %620 = vmatpush1.xpose.msra.mxu0 0.0
        %621 = vmatprep.subr.mxu0 0.0
        %622 = vmatpush1.xpose.msra.mxu0 0.0
        %623 = vmatprep.subr.mxu0 0.0
        %624 = vmatpush1.xpose.msra.mxu0 0.0
        %625 = vmatprep.subr.mxu0 0.0
        %626 = vmatpush1.xpose.msra.mxu0 %v593
        %627 = vmatprep.subr.mxu0 0.0
        %628 = vmatpush2.xpose.msra.mxu0 0.0
        %629 = vmatprep.subr.mxu0 0.0
        %630 = vmatpush2.xpose.msra.mxu0 0.0
        %631 = vmatprep.subr.mxu0 0.0
        %632 = vmatpush2.xpose.msra.mxu0 0.0
        %633 = vmatprep.subr.mxu0 0.0
        %634 = vmatpush2.xpose.msra.mxu0 0.0
        %635 = vmatprep.subr.mxu0 0.0
        %636 = vmatpush2.xpose.msra.mxu0 0.0
        %637 = vmatprep.subr.mxu0 0.0
        %638 = vmatpush2.xpose.msra.mxu0 0.0
        %639 = vmatprep.subr.mxu0 0.0
        %640 = vmatpush2.xpose.msra.mxu0 0.0
        %641 = vmatprep.subr.mxu0 0.0
        %642 = vmatpush2.xpose.msra.mxu0 0.0
        %643 = vmatprep.subr.mxu0 0.0
        %644 = vmatpush2.xpose.msra.mxu0 0.0
        %645 = vmatprep.subr.mxu0 0.0
        %646 = vmatpush2.xpose.msra.mxu0 0.0
        %647 = vmatprep.subr.mxu0 0.0
        %648 = vmatpush2.xpose.msra.mxu0 0.0
        %649 = vmatprep.subr.mxu0 0.0
        %650 = vmatpush2.xpose.msra.mxu0 0.0
        %651 = vmatprep.subr.mxu0 0.0
        %652 = vmatpush2.xpose.msra.mxu0 0.0
        %653 = vmatprep.subr.mxu0 0.0
        %654 = vmatpush2.xpose.msra.mxu0 0.0
        %655 = vmatprep.subr.mxu0 0.0
        %656 = vmatpush2.xpose.msra.mxu0 0.0
        %657 = vmatprep.subr.mxu0 0.0
        %658 = vmatpush2.xpose.msra.mxu0 0.0
        %659 = vmatprep.mubr.f32.mxu0 0.0
        %660 = vmatmul.mubr.f32.gmra.mxu0 %v590
        %v661 = vpop.f32.mrf.mxu0
        %v662 = vadd.f32 0.0, %v661
        %v663 = vpop.f32.mrf.mxu0
        %664 = vdwg.mxu0
        %v666 = vsel %vm291, %v279, 0
        %668 = vmatprep.subr.mxu0 0.0
        %669 = vmatpush1.msra.mxu0 0.0
        %670 = vmatprep.subr.mxu0 0.0
        %671 = vmatpush1.msra.mxu0 0.0
        %672 = vmatprep.subr.mxu0 0.0
        %673 = vmatpush1.msra.mxu0 0.0
        %674 = vmatprep.subr.mxu0 0.0
        %675 = vmatpush1.msra.mxu0 0.0
        %676 = vmatprep.subr.mxu0 0.0
        %677 = vmatpush1.msra.mxu0 0.0
        %678 = vmatprep.subr.mxu0 0.0
        %679 = vmatpush1.msra.mxu0 0.0
        %680 = vmatprep.subr.mxu0 0.0
        %681 = vmatpush1.msra.mxu0 0.0
        %682 = vmatprep.subr.mxu0 0.0
        %683 = vmatpush1.msra.mxu0 0.0
        %684 = vmatprep.subr.mxu0 0.0
        %685 = vmatpush1.msra.mxu0 0.0
        %686 = vmatprep.subr.mxu0 0.0
        %687 = vmatpush1.msra.mxu0 0.0
        %688 = vmatprep.subr.mxu0 0.0
        %689 = vmatpush1.msra.mxu0 0.0
        %690 = vmatprep.subr.mxu0 0.0
        %691 = vmatpush1.msra.mxu0 0.0
        %692 = vmatprep.subr.mxu0 0.0
        %693 = vmatpush1.msra.mxu0 0.0
        %694 = vmatprep.subr.mxu0 0.0
        %695 = vmatpush1.msra.mxu0 0.0
        %696 = vmatprep.subr.mxu0 0.0
        %697 = vmatpush1.msra.mxu0 0.0
        %698 = vmatprep.subr.mxu0 0.0
        %699 = vmatpush1.msra.mxu0 %v666
        %700 = vmatprep.subr.mxu0 0.0
        %701 = vmatpush2.msra.mxu0 0.0
        %702 = vmatprep.subr.mxu0 0.0
        %703 = vmatpush2.msra.mxu0 0.0
        %704 = vmatprep.subr.mxu0 0.0
        %705 = vmatpush2.msra.mxu0 0.0
        %706 = vmatprep.subr.mxu0 0.0
        %707 = vmatpush2.msra.mxu0 0.0
        %708 = vmatprep.subr.mxu0 0.0
        %709 = vmatpush2.msra.mxu0 0.0
        %710 = vmatprep.subr.mxu0 0.0
        %711 = vmatpush2.msra.mxu0 0.0
        %712 = vmatprep.subr.mxu0 0.0
        %713 = vmatpush2.msra.mxu0 0.0
        %714 = vmatprep.subr.mxu0 0.0
        %715 = vmatpush2.msra.mxu0 0.0
        %716 = vmatprep.subr.mxu0 0.0
        %717 = vmatpush2.msra.mxu0 0.0
        %718 = vmatprep.subr.mxu0 0.0
        %719 = vmatpush2.msra.mxu0 0.0
        %720 = vmatprep.subr.mxu0 0.0
        %721 = vmatpush2.msra.mxu0 0.0
        %722 = vmatprep.subr.mxu0 0.0
        %723 = vmatpush2.msra.mxu0 0.0
        %724 = vmatprep.subr.mxu0 0.0
        %725 = vmatpush2.msra.mxu0 0.0
        %726 = vmatprep.subr.mxu0 0.0
        %727 = vmatpush2.msra.mxu0 0.0
        %728 = vmatprep.subr.mxu0 0.0
        %729 = vmatpush2.msra.mxu0 0.0
        %730 = vmatprep.subr.mxu0 0.0
        %731 = vmatpush2.msra.mxu0 0.0
        %732 = vmatprep.mubr.f32.mxu0 0.0
        %733 = vmatmul.mubr.f32.gmra.mxu0 %v286
        %v734 = vpop.f32.mrf.mxu0
        %v735 = vadd.f32 0.0, %v734
        %v736 = vpop.f32.mrf.mxu0
        %737 = vmatprep.mubr.f32.mxu0 0.0
        %738 = vmatmul.mubr.f32.gmra.mxu0 %v289
        %v739 = vpop.f32.mrf.mxu0
        %v740 = vadd.f32 0.0, %v739
        %v741 = vpop.f32.mrf.mxu0
        %742 = vdwg.mxu0
        %v743 = vlaneseq
        %v744 = vshrl.u32 %v743, 7
        %v745 = vsub.s32 0, %v744
        %v746 = vrot.slane %v662, %v745
        %748 = vset.pattern.permute.xlu0 0
        %749 = vperm.xlu0 %748, %v735
        %v750 = vpop.permute.xlu0 %749
        %753 = vset.pattern.permute.xlu0 0
        %754 = vperm.xlu0 %753, %v740
        %v755 = vpop.permute.xlu0 %754
        %v757 = vadd.f32 %v746, %v750
        %v758 = vadd.f32 %v746, %v755
        %v759 = vmul.f32 %v757, 0.125
        %v760 = vmul.f32 %v758, 0.125
        %v761 = vtanh.pop %v759
        %v762 = vtanh.pop %v760
        %v763 = vmul.f32 %v761, 8.0
        %v764 = vmul.f32 %v762, 8.0
        %vm765 = vcmp.ge.f32.partialorder %v763, 0.0
        %vm766 = vcmp.ge.f32.partialorder %v764, 0.0
        %v767 = vmul.f32 %v763, 0.1
        %v768 = vmul.f32 %v764, 0.1
        %v769 = vsel %vm765, %v763, %v767
        %v770 = vsel %vm766, %v764, %v768
        %v771 = vmul.f32 %v769, 1.442695
        %v772 = vpow.pop %v771
        %v773 = vmul.f32 %v770, 1.442695
        %v774 = vpow.pop %v773
        %v775 = vmul.f32 %v772, %v272
        %v776 = vmul.f32 %v774, %v273
        %vm777 = vcmask 64512
        %v778 = vsel %vm777, %v775, 0.0
        %779 = vadd.xlane.f32.xlu0 %v778
        %v780 = vpop.xlane.xlu0 %779
        %v781 = vsel %vm777, %v776, 0.0
        %782 = vadd.xlane.f32.xlu0 %v781
        %v783 = vpop.xlane.xlu0 %782
        %v784 = vrcp.pop %v780
        %v785 = vrcp.pop %v783
        %v786 = vmul.f32 %v780, %v784
        %v787 = vmul.f32 %v783, %v785
        %v788 = vsub.f32 2.0, %v786
        %v789 = vsub.f32 2.0, %v787
        %v790 = vmul.f32 %v784, %v788
        %v791 = vmul.f32 %v785, %v789
        %v792 = vmul.f32 %v775, %v790
        %v793 = vmul.f32 %v776, %v791
        %v795 = vsel %vm777, %v792, 0
        %v798 = vsel %vm777, %v793, 0
        %800 = vmatprep.subr.mxu0 0.0
        %801 = vmatpush1.msra.mxu0 0.0
        %802 = vmatprep.subr.mxu0 0.0
        %803 = vmatpush1.msra.mxu0 0.0
        %804 = vmatprep.subr.mxu0 0.0
        %805 = vmatpush1.msra.mxu0 0.0
        %806 = vmatprep.subr.mxu0 0.0
        %807 = vmatpush1.msra.mxu0 0.0
        %808 = vmatprep.subr.mxu0 0.0
        %809 = vmatpush1.msra.mxu0 0.0
        %810 = vmatprep.subr.mxu0 0.0
        %811 = vmatpush1.msra.mxu0 0.0
        %812 = vmatprep.subr.mxu0 0.0
        %813 = vmatpush1.msra.mxu0 0.0
        %814 = vmatprep.subr.mxu0 0.0
        %815 = vmatpush1.msra.mxu0 0.0
        %816 = vmatprep.subr.mxu0 0.0
        %817 = vmatpush1.msra.mxu0 0.0
        %818 = vmatprep.subr.mxu0 0.0
        %819 = vmatpush1.msra.mxu0 0.0
        %820 = vmatprep.subr.mxu0 0.0
        %821 = vmatpush1.msra.mxu0 0.0
        %822 = vmatprep.subr.mxu0 0.0
        %823 = vmatpush1.msra.mxu0 0.0
        %824 = vmatprep.subr.mxu0 0.0
        %825 = vmatpush1.msra.mxu0 0.0
        %826 = vmatprep.subr.mxu0 0.0
        %827 = vmatpush1.msra.mxu0 0.0
        %828 = vmatprep.subr.mxu0 0.0
        %829 = vmatpush1.msra.mxu0 0.0
        %830 = vmatprep.subr.mxu0 0.0
        %831 = vmatpush1.msra.mxu0 %v555
        %832 = vmatprep.subr.mxu0 0.0
        %833 = vmatpush2.msra.mxu0 0.0
        %834 = vmatprep.subr.mxu0 0.0
        %835 = vmatpush2.msra.mxu0 0.0
        %836 = vmatprep.subr.mxu0 0.0
        %837 = vmatpush2.msra.mxu0 0.0
        %838 = vmatprep.subr.mxu0 0.0
        %839 = vmatpush2.msra.mxu0 0.0
        %840 = vmatprep.subr.mxu0 0.0
        %841 = vmatpush2.msra.mxu0 0.0
        %842 = vmatprep.subr.mxu0 0.0
        %843 = vmatpush2.msra.mxu0 0.0
        %844 = vmatprep.subr.mxu0 0.0
        %845 = vmatpush2.msra.mxu0 0.0
        %846 = vmatprep.subr.mxu0 0.0
        %847 = vmatpush2.msra.mxu0 0.0
        %848 = vmatprep.subr.mxu0 0.0
        %849 = vmatpush2.msra.mxu0 0.0
        %850 = vmatprep.subr.mxu0 0.0
        %851 = vmatpush2.msra.mxu0 0.0
        %852 = vmatprep.subr.mxu0 0.0
        %853 = vmatpush2.msra.mxu0 0.0
        %854 = vmatprep.subr.mxu0 0.0
        %855 = vmatpush2.msra.mxu0 0.0
        %856 = vmatprep.subr.mxu0 0.0
        %857 = vmatpush2.msra.mxu0 0.0
        %858 = vmatprep.subr.mxu0 0.0
        %859 = vmatpush2.msra.mxu0 0.0
        %860 = vmatprep.subr.mxu0 0.0
        %861 = vmatpush2.msra.mxu0 0.0
        %862 = vmatprep.subr.mxu0 0.0
        %863 = vmatpush2.msra.mxu0 0.0
        %864 = vmatprep.mubr.f32.mxu0 0.0
        %865 = vmatmul.mubr.f32.gmra.mxu0 %v795
        %v866 = vpop.f32.mrf.mxu0
        %v867 = vadd.f32 0.0, %v866
        %v868 = vpop.f32.mrf.mxu0
        %869 = vmatprep.mubr.f32.mxu0 0.0
        %870 = vmatmul.mubr.f32.gmra.mxu0 %v798
        %v871 = vpop.f32.mrf.mxu0
        %v872 = vadd.f32 0.0, %v871
        %v873 = vpop.f32.mrf.mxu0
        %874 = vdwg.mxu0
        %v876 = vsel %vm588, %v867, 0
        %v879 = vsel %vm588, %v872, 0
        %881 = vmatprep.subr.mxu0 0.0
        %882 = vmatpush1.msra.mxu0 0.0
        %883 = vmatprep.subr.mxu0 0.0
        %884 = vmatpush1.msra.mxu0 0.0
        %885 = vmatprep.subr.mxu0 0.0
        %886 = vmatpush1.msra.mxu0 0.0
        %887 = vmatprep.subr.mxu0 0.0
        %888 = vmatpush1.msra.mxu0 0.0
        %889 = vmatprep.subr.mxu0 0.0
        %890 = vmatpush1.msra.mxu0 0.0
        %891 = vmatprep.subr.mxu0 0.0
        %892 = vmatpush1.msra.mxu0 0.0
        %893 = vmatprep.subr.mxu0 0.0
        %894 = vmatpush1.msra.mxu0 0.0
        %895 = vmatprep.subr.mxu0 0.0
        %896 = vmatpush1.msra.mxu0 0.0
        %897 = vmatprep.subr.mxu0 0.0
        %898 = vmatpush1.msra.mxu0 0.0
        %899 = vmatprep.subr.mxu0 0.0
        %900 = vmatpush1.msra.mxu0 0.0
        %901 = vmatprep.subr.mxu0 0.0
        %902 = vmatpush1.msra.mxu0 0.0
        %903 = vmatprep.subr.mxu0 0.0
        %904 = vmatpush1.msra.mxu0 0.0
        %905 = vmatprep.subr.mxu0 0.0
        %906 = vmatpush1.msra.mxu0 %v278
        %907 = vmatprep.subr.mxu0 0.0
        %908 = vmatpush1.msra.mxu0 %v277
        %909 = vmatprep.subr.mxu0 0.0
        %910 = vmatpush1.msra.mxu0 %v276
        %911 = vmatprep.subr.mxu0 0.0
        %912 = vmatpush1.msra.mxu0 %v275
        %913 = vmatprep.subr.mxu0 0.0
        %914 = vmatpush2.msra.mxu0 0.0
        %915 = vmatprep.subr.mxu0 0.0
        %916 = vmatpush2.msra.mxu0 0.0
        %917 = vmatprep.subr.mxu0 0.0
        %918 = vmatpush2.msra.mxu0 0.0
        %919 = vmatprep.subr.mxu0 0.0
        %920 = vmatpush2.msra.mxu0 0.0
        %921 = vmatprep.subr.mxu0 0.0
        %922 = vmatpush2.msra.mxu0 0.0
        %923 = vmatprep.subr.mxu0 0.0
        %924 = vmatpush2.msra.mxu0 0.0
        %925 = vmatprep.subr.mxu0 0.0
        %926 = vmatpush2.msra.mxu0 0.0
        %927 = vmatprep.subr.mxu0 0.0
        %928 = vmatpush2.msra.mxu0 0.0
        %929 = vmatprep.subr.mxu0 0.0
        %930 = vmatpush2.msra.mxu0 0.0
        %931 = vmatprep.subr.mxu0 0.0
        %932 = vmatpush2.msra.mxu0 0.0
        %933 = vmatprep.subr.mxu0 0.0
        %934 = vmatpush2.msra.mxu0 0.0
        %935 = vmatprep.subr.mxu0 0.0
        %936 = vmatpush2.msra.mxu0 0.0
        %937 = vmatprep.subr.mxu0 0.0
        %938 = vmatpush2.msra.mxu0 0.0
        %939 = vmatprep.subr.mxu0 0.0
        %940 = vmatpush2.msra.mxu0 0.0
        %941 = vmatprep.subr.mxu0 0.0
        %942 = vmatpush2.msra.mxu0 0.0
        %943 = vmatprep.subr.mxu0 0.0
        %944 = vmatpush2.msra.mxu0 0.0
        %945 = vmatprep.mubr.f32.mxu0 0.0
        %946 = vmatmul.mubr.f32.gmra.mxu0 %v876
        %v947 = vpop.f32.mrf.mxu0
        %v948 = vadd.f32 0.0, %v947
        %v949 = vpop.f32.mrf.mxu0
        %950 = vmatprep.mubr.f32.mxu0 0.0
        %951 = vmatmul.mubr.f32.gmra.mxu0 %v879
        %v952 = vpop.f32.mrf.mxu0
        %v953 = vadd.f32 0.0, %v952
        %v954 = vpop.f32.mrf.mxu0
        %955 = vdwg.mxu0
        %vm956 = vcmp.ge.f32.partialorder %v948, 0.0
        %vm957 = vcmp.ge.f32.partialorder %v953, 0.0
        %v958 = vmul.f32 %v948, 0.1
        %v959 = vmul.f32 %v953, 0.1
        %v960 = vsel %vm956, %v948, %v958
        %v961 = vsel %vm957, %v953, %v959
        %962 = vst.msk [vmem:[%s259] sm:$0xff] %vm588, %v960
        %963 = vst.msk [vmem:[%s259 + $0x8] sm:$0xff] %vm588, %v961
        %s964 = sand.u32 %s164, 1
        %s965 = scalar_lea.sflag [#allocation3], %s964
        %s966 = sand.u32 %s164, 1
        %s967 = smul.addr %s966, 16
        %s968 = scalar_lea.vmem [#allocation2], %s967
        // Predicated region
        $region45: #{tpu_custom_call.1} parent=43 // pred_check
          %p969 = pneg %p174
        $region46: #{tpu_custom_call.1} parent=43 // pred_check_branch
          %971 = sbr.rel (%p969) target = $region48
        $region47: #{tpu_custom_call.1} parent=43 // pred_region
          %s973 = ssub.s32 256, 256
          %974 = vsyncadd %s965, %s973
          %s975 = smul.addr %s20, 2
          %s976 = smul.addr %s975, 128
          %s977 = scalar_lea.hbm %s6, %s976
          %s978 = sshll.u32 %s968, 4
          %s979 = int_to_ptr.vmem [resolvable:$true] %s978
          %984 = dma.vmem_to_hbm [thread:$0]  %s979, 256, %s977, %s965, 128, 128, 8
        $region48: #{tpu_custom_call.1} parent=43 // pred_fallthru
          _
      $region44: #{tpu_custom_call.1} parent=5 // pred_fallthru
        _
      %p985 = scmp.le.s32.totalorder 2, %s15
      // Predicated region
      $region49: #{tpu_custom_call.1} parent=5 // pred_check
        %p986 = pneg %p985
      $region50: #{tpu_custom_call.1} parent=5 // pred_check_branch
        %988 = sbr.rel (%p986) target = $region52
      $region51: #{tpu_custom_call.1} parent=5 // pred_region
        %s989 = ssub.s32 %s15, 2
        // Predicated region
        $region53: #{tpu_custom_call.1} parent=51 // pred_check
          %p990 = pneg %p180
        $region54: #{tpu_custom_call.1} parent=51 // pred_check_branch
          %992 = sbr.rel (%p990) target = $region56
        $region55: #{tpu_custom_call.1} parent=51 // pred_region
          %s993 = sand.u32 %s165, 1
          %s994 = scalar_lea.sflag [#allocation3], %s993
          %s995 = sand.u32 %s165, 1
          %s996 = smul.addr %s995, 16
          %s997 = scalar_lea.vmem [#allocation2], %s996
          %998 = dma.done %s994, 256
        $region56: #{tpu_custom_call.1} parent=51 // pred_fallthru
          _
      $region52: #{tpu_custom_call.1} parent=5 // pred_fallthru
        _
    $region6: #{tpu_custom_call.1} parent=1 // loop_footer
      %s19 = sadd.s32 1, %s15
    $region7: #{tpu_custom_call.1} parent=1 // loop_footer_branch
      %14 = sbr.rel target = $region3
    $region8: #{tpu_custom_call.1} parent=1 // loop_exit
      _
    %999 = vsyncpa [#allocation3], 1
    %s1000 = scalar_lea.sflag [#allocation3], 1
    %1001 = vsyncpa %s1000, 1

</llo_original>
